<compile_context>
chip_gen: v6e
topology: v6e:2x2x1
jax: 0.10.0
libtpu: 0.0.40
codegen_flags: <defaults>
</compile_context>

<pallas_src>
import functools
from typing import NamedTuple

import jax
import jax.numpy as jnp
import numpy as np
from jax.experimental import pallas as pl
from jax.experimental.pallas import tpu as pltpu


def _round_up(n, m):
    return (n + m - 1) // m * m


class ProjectorMeta(NamedTuple):
    S: int
    E: int
    H1: int
    H2: int
    O: int
    off_w1x: int
    off_w1s: int
    off_w2: int
    off_w3: int
    off_b1: int
    off_b2: int


def prepare_params(params, seq_len, enc_in, dtype=jnp.float32):
    """One-time weight plumbing (hoisted out of the per-call forward path).

    Folds Conv1d(seq_len->1, k=3, circular, no bias) into the x-row block of
    the first Linear's weights, then packs all weights/biases into a single
    contiguous [R, C] slab whose blocks start at sublane-aligned (multiple of
    8) row offsets, so the kernel carves zero-cost static views.

    conv[b,e] = sum_c wc[c,0]*x[b,c,(e-1)%E] + wc[c,1]*x[b,c,e] + wc[c,2]*x[b,c,(e+1)%E]
    => coefficient of x[b,c,l] in (conv @ w1[:E]) is
       wc[c,0]*w1[(l+1)%E] + wc[c,1]*w1[l] + wc[c,2]*w1[(l-1)%E]
    """
    wc, w1, b1, w2, b2, w3 = params
    S, E = seq_len, enc_in
    H1 = w1.shape[1]
    H2 = w2.shape[1]
    O = w3.shape[1]

    w1x = w1[:E]                       # rows multiplied by the conv output
    w1s = w1[E:]                       # rows multiplied by stats
    w1x_p = jnp.roll(w1x, -1, axis=0)  # w1[(l+1) % E]
    w1x_m = jnp.roll(w1x, 1, axis=0)   # w1[(l-1) % E]
    w1x_eff = (wc[:, 0][:, None, None] * w1x_p[None]
               + wc[:, 1][:, None, None] * w1x[None]
               + wc[:, 2][:, None, None] * w1x_m[None])   # [S, E, H1]
    w1x_eff = w1x_eff.reshape(S * E, H1)

    # Pack everything into one slab [R, C] (single HBM->VMEM DMA in the kernel).
    C = max(H1, H2, O)
    blocks = [w1x_eff, w1s, w2, w3, b1.reshape(1, H1), b2.reshape(1, H2)]
    offsets, padded, row = [], [], 0
    for blk in blocks:
        r, c = blk.shape
        rp = _round_up(r, 8)           # keep every block sublane-aligned
        offsets.append(row)
        padded.append(jnp.pad(blk, ((0, rp - r), (0, C - c))))
        row += rp
    # NOTE: dtype=jnp.bfloat16 here halves HBM traffic on v6e/v7x (MXU is
    # bf16-native) at a small precision cost vs the f32 reference.
    w_slab = jnp.concatenate(padded, axis=0).astype(dtype)

    meta = ProjectorMeta(S=S, E=E, H1=H1, H2=H2, O=O,
                         off_w1x=offsets[0], off_w1s=offsets[1],
                         off_w2=offsets[2], off_w3=offsets[3],
                         off_b1=offsets[4], off_b2=offsets[5])
    return w_slab, meta


def projector_kernel(x_ref, s_ref, w_ref, y_ref, *, S, E, H1, H2, O,
                     off_w1x, off_w1s, off_w2, off_w3, off_b1, off_b2):
    # Static, sublane-aligned views into the packed weight slab.
    w1x = w_ref[off_w1x:off_w1x + S * E, :H1]
    w1s = w_ref[off_w1s:off_w1s + E, :H1]
    w2 = w_ref[off_w2:off_w2 + H1, :H2]
    w3 = w_ref[off_w3:off_w3 + H2, :O]
    b1 = w_ref[off_b1:off_b1 + 1, :H1]
    b2 = w_ref[off_b2:off_b2 + 1, :H2]
    wdt = w_ref.dtype

    # Layer 1: circular-conv-folded Linear, split over (x, stats) row blocks.
    h = jnp.dot(x_ref[...], w1x, preferred_element_type=jnp.float32)
    h = h + jnp.dot(s_ref[...], w1s, preferred_element_type=jnp.float32)
    h = jnp.maximum(h + b1, 0.0)
    # Layer 2: Linear + bias + ReLU.
    h = jnp.dot(h.astype(wdt), w2, preferred_element_type=jnp.float32)
    h = jnp.maximum(h + b2, 0.0)
    # Layer 3: Linear, no bias.
    y = jnp.dot(h.astype(wdt), w3, preferred_element_type=jnp.float32)
    y_ref[...] = y.astype(y_ref.dtype)


def projector_forward(x, stats, w_slab, meta, *, block_b=1024):
    """x: [B, S, E], stats: [B, 1, E], packed weight slab -> y: [B, output_dim]."""
    B, S, E = x.shape
    assert meta.S == S and meta.E == E
    O = meta.O

    x2 = x.reshape(B, S * E)           # contiguous reshape, free
    s2 = stats.reshape(B, E)           # contiguous reshape, free

    kernel = functools.partial(projector_kernel, **meta._asdict())
    flops = 2 * B * (S * E * meta.H1 + E * meta.H1
                     + meta.H1 * meta.H2 + meta.H2 * O)
    bytes_accessed = (x2.size * x2.dtype.itemsize
                      + s2.size * s2.dtype.itemsize
                      + w_slab.size * w_slab.dtype.itemsize
                      + B * O * x.dtype.itemsize)
    cost = pl.CostEstimate(flops=flops, transcendentals=0,
                           bytes_accessed=bytes_accessed)
    vmem = lambda: pl.BlockSpec(memory_space=pltpu.MemorySpace.VMEM)

    if B <= block_b:
        # Small batch: single invocation, all operands whole-array VMEM resident.
        return pl.pallas_call(
            kernel,
            out_shape=jax.ShapeDtypeStruct((B, O), x.dtype),
            in_specs=[vmem(), vmem(), vmem()],
            out_specs=vmem(),
            cost_estimate=cost,
        )(x2, s2, w_slab)

    # Large batch: row-tiled grid over B (pipelined; sharded across both v7x
    # TensorCores), weights mapped to a constant block so they stay resident.
    # TODO(synk): for very large B, write a lane-dense (padded-to-128) output
    # block and slice in the wrapper to avoid masked vst on the 16-wide output.
    nb = pl.cdiv(B, block_b)
    Bp = nb * block_b
    if Bp != B:
        x2 = jnp.pad(x2, ((0, Bp - B), (0, 0)))
        s2 = jnp.pad(s2, ((0, Bp - B), (0, 0)))
    y = pl.pallas_call(
        kernel,
        out_shape=jax.ShapeDtypeStruct((Bp, O), x.dtype),
        grid=(nb,),
        in_specs=[
            pl.BlockSpec((block_b, S * E), lambda i: (i, 0)),
            pl.BlockSpec((block_b, E), lambda i: (i, 0)),
            pl.BlockSpec(w_slab.shape, lambda i: (0, 0)),
        ],
        out_specs=pl.BlockSpec((block_b, O), lambda i: (i, 0)),
        compiler_params=pltpu.CompilerParams(
            dimension_semantics=("parallel",),
            vmem_limit_bytes=64 << 20),
        cost_estimate=cost,
    )(x2, s2, w_slab)
    return y[:B] if Bp != B else y


def projector_reference(x, stats, params):
    """Pure-JAX reference matching the PyTorch module (unfolded math)."""
    wc, w1, b1, w2, b2, w3 = params
    B = x.shape[0]
    x_m1 = jnp.roll(x, 1, axis=-1)    # x[(l-1) mod E]
    x_p1 = jnp.roll(x, -1, axis=-1)   # x[(l+1) mod E]
    conv = (jnp.einsum('bce,c->be', x_m1, wc[:, 0])
            + jnp.einsum('bce,c->be', x, wc[:, 1])
            + jnp.einsum('bce,c->be', x_p1, wc[:, 2]))
    z = jnp.concatenate([conv, stats.reshape(B, -1)], axis=-1)
    h = jax.nn.relu(z @ w1 + b1)
    h = jax.nn.relu(h @ w2 + b2)
    return h @ w3


def init_params(key, enc_in, seq_len, hidden_dims, output_dim, kernel_size=3):
    ks = jax.random.split(key, 6)
    scale = 0.1
    wc = scale * jax.random.normal(ks[0], (seq_len, kernel_size), jnp.float32)
    w1 = scale * jax.random.normal(ks[1], (2 * enc_in, hidden_dims[0]), jnp.float32)
    b1 = scale * jax.random.normal(ks[2], (1, hidden_dims[0]), jnp.float32)
    w2 = scale * jax.random.normal(ks[3], (hidden_dims[0], hidden_dims[1]), jnp.float32)
    b2 = scale * jax.random.normal(ks[4], (1, hidden_dims[1]), jnp.float32)
    w3 = scale * jax.random.normal(ks[5], (hidden_dims[1], output_dim), jnp.float32)
    return (wc, w1, b1, w2, b2, w3)


if __name__ == "__main__":
    # Projector(enc_in=16, seq_len=8, hidden_dims=[32, 32], hidden_layers=2,
    #           output_dim=16, kernel_size=3)
    B, S, E = 2, 8, 16
    hidden_dims = [32, 32]
    output_dim = 16

    key = jax.random.PRNGKey(0)
    kx, kstats, kparams = jax.random.split(key, 3)
    x = jax.random.normal(kx, (B, S, E), jnp.float32)
    stats = jax.random.normal(kstats, (B, 1, E), jnp.float32)
    params = init_params(kparams, E, S, hidden_dims, output_dim)

    # One-time weight fold / packing (amortized across forwards).
    w_slab, meta = prepare_params(params, S, E, dtype=jnp.float32)

    fwd = jax.jit(lambda xx, ss, ww: projector_forward(xx, ss, ww, meta))
    y = fwd(x, stats, w_slab)
    y = jax.block_until_ready(y)

    y_ref = projector_reference(x, stats, params)
    np.testing.assert_allclose(np.asarray(y), np.asarray(y_ref),
                               rtol=1e-4, atol=2e-5)
    print("KERNEL_OK")
</pallas_src>

<mosaic_0001>
module attributes {stable_mosaic.version = 11 : i64} {
  func.func @projector_kernel(%arg0: memref<2x128xf32, #tpu.memory_space<vmem>>, %arg1: memref<2x16xf32, #tpu.memory_space<vmem>>, %arg2: memref<224x32xf32, #tpu.memory_space<vmem>>, %arg3: memref<2x16xf32, #tpu.memory_space<vmem>>) attributes {dimension_semantics = [], scalar_prefetch = 0 : i64, scratch_operands = 0 : i64, tpu.core_type = #tpu.core_type<tc>} {
    %c0 = arith.constant 0 : index
    %c0_0 = arith.constant 0 : index
    %0 = vector.load %arg2[%c0, %c0_0] : memref<224x32xf32, #tpu.memory_space<vmem>>, vector<128x32xf32>
    %c128 = arith.constant 128 : index
    %c0_1 = arith.constant 0 : index
    %1 = vector.load %arg2[%c128, %c0_1] : memref<224x32xf32, #tpu.memory_space<vmem>>, vector<16x32xf32>
    %c144 = arith.constant 144 : index
    %c0_2 = arith.constant 0 : index
    %2 = vector.load %arg2[%c144, %c0_2] : memref<224x32xf32, #tpu.memory_space<vmem>>, vector<32x32xf32>
    %c176 = arith.constant 176 : index
    %c0_3 = arith.constant 0 : index
    %3 = vector.load %arg2[%c176, %c0_3] : memref<224x32xf32, #tpu.memory_space<vmem>>, vector<32x16xf32>
    %c208 = arith.constant 208 : index
    %c0_4 = arith.constant 0 : index
    %4 = vector.load %arg2[%c208, %c0_4] : memref<224x32xf32, #tpu.memory_space<vmem>>, vector<1x32xf32>
    %c216 = arith.constant 216 : index
    %c0_5 = arith.constant 0 : index
    %5 = vector.load %arg2[%c216, %c0_5] : memref<224x32xf32, #tpu.memory_space<vmem>>, vector<1x32xf32>
    %c0_6 = arith.constant 0 : index
    %c0_7 = arith.constant 0 : index
    %6 = vector.load %arg0[%c0_6, %c0_7] : memref<2x128xf32, #tpu.memory_space<vmem>>, vector<2x128xf32>
    %cst = arith.constant dense<0.000000e+00> : vector<2x32xf32>
    %7 = tpu.matmul %6, %0, %cst {dimension_numbers = #tpu.dot_dimension_numbers<[1], [0], [0], [1], [0, 0, 1, 1], [], []>} : vector<2x128xf32>, vector<128x32xf32>, vector<2x32xf32> -> vector<2x32xf32>
    %c0_8 = arith.constant 0 : index
    %c0_9 = arith.constant 0 : index
    %8 = vector.load %arg1[%c0_8, %c0_9] : memref<2x16xf32, #tpu.memory_space<vmem>>, vector<2x16xf32>
    %cst_10 = arith.constant dense<0.000000e+00> : vector<2x32xf32>
    %9 = tpu.matmul %8, %1, %cst_10 {dimension_numbers = #tpu.dot_dimension_numbers<[1], [0], [0], [1], [0, 0, 1, 1], [], []>} : vector<2x16xf32>, vector<16x32xf32>, vector<2x32xf32> -> vector<2x32xf32>
    %10 = arith.addf %7, %9 : vector<2x32xf32>
    %11 = vector.broadcast %4 : vector<1x32xf32> to vector<2x32xf32>
    %12 = arith.addf %10, %11 : vector<2x32xf32>
    %cst_11 = arith.constant 0.000000e+00 : f32
    %13 = vector.broadcast %cst_11 : f32 to vector<2x32xf32>
    %14 = arith.maximumf %12, %13 : vector<2x32xf32>
    %cst_12 = arith.constant dense<0.000000e+00> : vector<2x32xf32>
    %15 = tpu.matmul %14, %2, %cst_12 {dimension_numbers = #tpu.dot_dimension_numbers<[1], [0], [0], [1], [0, 0, 1, 1], [], []>} : vector<2x32xf32>, vector<32x32xf32>, vector<2x32xf32> -> vector<2x32xf32>
    %16 = vector.broadcast %5 : vector<1x32xf32> to vector<2x32xf32>
    %17 = arith.addf %15, %16 : vector<2x32xf32>
    %cst_13 = arith.constant 0.000000e+00 : f32
    %18 = vector.broadcast %cst_13 : f32 to vector<2x32xf32>
    %19 = arith.maximumf %17, %18 : vector<2x32xf32>
    %cst_14 = arith.constant dense<0.000000e+00> : vector<2x16xf32>
    %20 = tpu.matmul %19, %3, %cst_14 {dimension_numbers = #tpu.dot_dimension_numbers<[1], [0], [0], [1], [0, 0, 1, 1], [], []>} : vector<2x32xf32>, vector<32x16xf32>, vector<2x16xf32> -> vector<2x16xf32>
    %c0_15 = arith.constant 0 : index
    %c0_16 = arith.constant 0 : index
    %21 = vector.load %arg3[%c0_15, %c0_16] : memref<2x16xf32, #tpu.memory_space<vmem>>, vector<2x16xf32>
    tpu.vector_store %arg3[%c0_15, %c0_16], %20 {strides = array<i32>} : memref<2x16xf32, #tpu.memory_space<vmem>>, vector<2x16xf32>,
    return
  }
}

</mosaic_0001>

<llo_original>
// kernel: _lambda_.1
$region0: #{_lambda_.1}
  #allocation0 [shape = 'u32[]', space=smem, size = 0x4, offset = 0x4, fixed_abs, tag = 'smem constant byte address 0x4 - core index']
  #allocation1 [shape = 'u32[144,128]{1,0:T(1,128)}', space=vmem, size = 0x12000, scoped, tag = 'internal scratch']
  %s0 = inlined_call_operand.vmem [shape: f32[2,128], index: 0, kind: input, shape index: {}]
  %s1 = inlined_call_operand.vmem [shape: f32[2,16], index: 1, kind: input, shape index: {}]
  %s2 = inlined_call_operand.vmem [shape: f32[224,32], index: 2, kind: input, shape index: {}]
  %s3 = inlined_call_operand.hbm [shape: f32[2,16], index: 3, kind: output, shape index: {}]
  %s4 = sld [smem:[#allocation0]]
  $region22: #{_lambda_.1} parent=0
    _
  %s6 = ssub.s32 1, %s4
  %s7 = scalar_select 0, %s6, %s4
  $region1: #{_lambda_.1} parent=0
    #allocation2 [shape = 'u8[1024]{0}', space=vmem, size = 0x400, scoped, tag = 'output window, operand 0, single buffered']
    #allocation3 [shape = 's32[1]{0}', space=sflag, size = 0x4, scoped, tag = 'scoped memory for _lambda_.1']
    %8 = vsyncpa [#allocation3], 0
    // Predicated region
    $region2: #{_lambda_.1} parent=1 // pred_check
      _
    $region3: #{_lambda_.1} parent=1 // pred_check_branch
      %10 = sbr.rel (0) target = $region5
    $region4: #{_lambda_.1} parent=1 // pred_region
      _
    $region5: #{_lambda_.1} parent=1 // pred_fallthru
      _
    // Predicated region
    $region6: #{_lambda_.1} parent=1 // pred_check
      _
    $region7: #{_lambda_.1} parent=1 // pred_check_branch
      %12 = sbr.rel (0) target = $region9
    $region8: #{_lambda_.1} parent=1 // pred_region
      _
    $region9: #{_lambda_.1} parent=1 // pred_fallthru
      _
    // Predicated region
    $region10: #{_lambda_.1} parent=1 // pred_check
      _
    $region11: #{_lambda_.1} parent=1 // pred_check_branch
      %14 = sbr.rel (0) target = $region13
    $region12: #{_lambda_.1} parent=1 // pred_region
      _
    $region13: #{_lambda_.1} parent=1 // pred_fallthru
      _
    %v15 = vld [vmem:[%s2] sm:$0xff]
    %v16 = vld [vmem:[%s2 + $0x8] sm:$0xff]
    %v17 = vld [vmem:[%s2 + $0x10] sm:$0xff]
    %v18 = vld [vmem:[%s2 + $0x18] sm:$0xff]
    %v19 = vld [vmem:[%s2 + $0x20] sm:$0xff]
    %v20 = vld [vmem:[%s2 + $0x28] sm:$0xff]
    %v21 = vld [vmem:[%s2 + $0x30] sm:$0xff]
    %v22 = vld [vmem:[%s2 + $0x38] sm:$0xff]
    %v23 = vld [vmem:[%s2 + $0x40] sm:$0xff]
    %v24 = vld [vmem:[%s2 + $0x48] sm:$0xff]
    %v25 = vld [vmem:[%s2 + $0x50] sm:$0xff]
    %v26 = vld [vmem:[%s2 + $0x58] sm:$0xff]
    %v27 = vld [vmem:[%s2 + $0x60] sm:$0xff]
    %v28 = vld [vmem:[%s2 + $0x68] sm:$0xff]
    %v29 = vld [vmem:[%s2 + $0x70] sm:$0xff]
    %v30 = vld [vmem:[%s2 + $0x78] sm:$0xff]
    %v31 = vld [vmem:[%s2 + $0x80] sm:$0xff]
    %v32 = vld [vmem:[%s2 + $0x88] sm:$0xff]
    %v33 = vld [vmem:[%s2 + $0x90] sm:$0xff]
    %v34 = vld [vmem:[%s2 + $0x98] sm:$0xff]
    %v35 = vld [vmem:[%s2 + $0xa0] sm:$0xff]
    %v36 = vld [vmem:[%s2 + $0xa8] sm:$0xff]
    %v37 = vld [vmem:[%s2 + $0xb0] sm:$0xff]
    %v38 = vld [vmem:[%s2 + $0xb8] sm:$0xff]
    %v39 = vld [vmem:[%s2 + $0xc0] sm:$0xff]
    %v40 = vld [vmem:[%s2 + $0xc8] sm:$0xff]
    %v41 = vld [vmem:[%s2 + $0xd0] sm:$0x1]
    %v42 = vld [vmem:[%s2 + $0xd8] sm:$0x1]
    %v43 = vld [vmem:[%s0] sm:$0x3]
    %v44 = vld [vmem:[%s1] sm:$0x3]
    %vm45 = vcmask 130048
    %v47 = vsel %vm45, %v44, 0
    %49 = vmatprep.subr.mxu0 0.0
    %50 = vmatpush1.msra.mxu0 0.0
    %51 = vmatprep.subr.mxu0 0.0
    %52 = vmatpush1.msra.mxu0 0.0
    %53 = vmatprep.subr.mxu0 0.0
    %54 = vmatpush1.msra.mxu0 0.0
    %55 = vmatprep.subr.mxu0 0.0
    %56 = vmatpush1.msra.mxu0 0.0
    %57 = vmatprep.subr.mxu0 0.0
    %58 = vmatpush1.msra.mxu0 0.0
    %59 = vmatprep.subr.mxu0 0.0
    %60 = vmatpush1.msra.mxu0 0.0
    %61 = vmatprep.subr.mxu0 0.0
    %62 = vmatpush1.msra.mxu0 0.0
    %63 = vmatprep.subr.mxu0 0.0
    %64 = vmatpush1.msra.mxu0 0.0
    %65 = vmatprep.subr.mxu0 0.0
    %66 = vmatpush1.msra.mxu0 0.0
    %67 = vmatprep.subr.mxu0 0.0
    %68 = vmatpush1.msra.mxu0 0.0
    %69 = vmatprep.subr.mxu0 0.0
    %70 = vmatpush1.msra.mxu0 0.0
    %71 = vmatprep.subr.mxu0 0.0
    %72 = vmatpush1.msra.mxu0 0.0
    %73 = vmatprep.subr.mxu0 0.0
    %74 = vmatpush1.msra.mxu0 0.0
    %75 = vmatprep.subr.mxu0 0.0
    %76 = vmatpush1.msra.mxu0 0.0
    %77 = vmatprep.subr.mxu0 0.0
    %78 = vmatpush1.msra.mxu0 %v32
    %79 = vmatprep.subr.mxu0 0.0
    %80 = vmatpush1.msra.mxu0 %v31
    %81 = vmatprep.subr.mxu0 0.0
    %82 = vmatpush2.msra.mxu0 0.0
    %83 = vmatprep.subr.mxu0 0.0
    %84 = vmatpush2.msra.mxu0 0.0
    %85 = vmatprep.subr.mxu0 0.0
    %86 = vmatpush2.msra.mxu0 0.0
    %87 = vmatprep.subr.mxu0 0.0
    %88 = vmatpush2.msra.mxu0 0.0
    %89 = vmatprep.subr.mxu0 0.0
    %90 = vmatpush2.msra.mxu0 0.0
    %91 = vmatprep.subr.mxu0 0.0
    %92 = vmatpush2.msra.mxu0 0.0
    %93 = vmatprep.subr.mxu0 0.0
    %94 = vmatpush2.msra.mxu0 0.0
    %95 = vmatprep.subr.mxu0 0.0
    %96 = vmatpush2.msra.mxu0 0.0
    %97 = vmatprep.subr.mxu0 0.0
    %98 = vmatpush2.msra.mxu0 0.0
    %99 = vmatprep.subr.mxu0 0.0
    %100 = vmatpush2.msra.mxu0 0.0
    %101 = vmatprep.subr.mxu0 0.0
    %102 = vmatpush2.msra.mxu0 0.0
    %103 = vmatprep.subr.mxu0 0.0
    %104 = vmatpush2.msra.mxu0 0.0
    %105 = vmatprep.subr.mxu0 0.0
    %106 = vmatpush2.msra.mxu0 0.0
    %107 = vmatprep.subr.mxu0 0.0
    %108 = vmatpush2.msra.mxu0 0.0
    %109 = vmatprep.subr.mxu0 0.0
    %110 = vmatpush2.msra.mxu0 0.0
    %111 = vmatprep.subr.mxu0 0.0
    %112 = vmatpush2.msra.mxu0 0.0
    %113 = vmatprep.mubr.f32.mxu0 0.0
    %114 = vmatmul.mubr.f32.gmra.mxu0 %v47
    %v115 = vpop.f32.mrf.mxu0
    %v116 = vadd.f32 0.0, %v115
    %v117 = vpop.f32.mrf.mxu0
    %118 = vdwg.mxu0
    %119 = vmatprep.subr.mxu0 0.0
    %120 = vmatpush1.msra.mxu0 %v30
    %121 = vmatprep.subr.mxu0 0.0
    %122 = vmatpush1.msra.mxu0 %v29
    %123 = vmatprep.subr.mxu0 0.0
    %124 = vmatpush1.msra.mxu0 %v28
    %125 = vmatprep.subr.mxu0 0.0
    %126 = vmatpush1.msra.mxu0 %v27
    %127 = vmatprep.subr.mxu0 0.0
    %128 = vmatpush1.msra.mxu0 %v26
    %129 = vmatprep.subr.mxu0 0.0
    %130 = vmatpush1.msra.mxu0 %v25
    %131 = vmatprep.subr.mxu0 0.0
    %132 = vmatpush1.msra.mxu0 %v24
    %133 = vmatprep.subr.mxu0 0.0
    %134 = vmatpush1.msra.mxu0 %v23
    %135 = vmatprep.subr.mxu0 0.0
    %136 = vmatpush1.msra.mxu0 %v22
    %137 = vmatprep.subr.mxu0 0.0
    %138 = vmatpush1.msra.mxu0 %v21
    %139 = vmatprep.subr.mxu0 0.0
    %140 = vmatpush1.msra.mxu0 %v20
    %141 = vmatprep.subr.mxu0 0.0
    %142 = vmatpush1.msra.mxu0 %v19
    %143 = vmatprep.subr.mxu0 0.0
    %144 = vmatpush1.msra.mxu0 %v18
    %145 = vmatprep.subr.mxu0 0.0
    %146 = vmatpush1.msra.mxu0 %v17
    %147 = vmatprep.subr.mxu0 0.0
    %148 = vmatpush1.msra.mxu0 %v16
    %149 = vmatprep.subr.mxu0 0.0
    %150 = vmatpush1.msra.mxu0 %v15
    %151 = vmatprep.subr.mxu0 0.0
    %152 = vmatpush2.msra.mxu0 0.0
    %153 = vmatprep.subr.mxu0 0.0
    %154 = vmatpush2.msra.mxu0 0.0
    %155 = vmatprep.subr.mxu0 0.0
    %156 = vmatpush2.msra.mxu0 0.0
    %157 = vmatprep.subr.mxu0 0.0
    %158 = vmatpush2.msra.mxu0 0.0
    %159 = vmatprep.subr.mxu0 0.0
    %160 = vmatpush2.msra.mxu0 0.0
    %161 = vmatprep.subr.mxu0 0.0
    %162 = vmatpush2.msra.mxu0 0.0
    %163 = vmatprep.subr.mxu0 0.0
    %164 = vmatpush2.msra.mxu0 0.0
    %165 = vmatprep.subr.mxu0 0.0
    %166 = vmatpush2.msra.mxu0 0.0
    %167 = vmatprep.subr.mxu0 0.0
    %168 = vmatpush2.msra.mxu0 0.0
    %169 = vmatprep.subr.mxu0 0.0
    %170 = vmatpush2.msra.mxu0 0.0
    %171 = vmatprep.subr.mxu0 0.0
    %172 = vmatpush2.msra.mxu0 0.0
    %173 = vmatprep.subr.mxu0 0.0
    %174 = vmatpush2.msra.mxu0 0.0
    %175 = vmatprep.subr.mxu0 0.0
    %176 = vmatpush2.msra.mxu0 0.0
    %177 = vmatprep.subr.mxu0 0.0
    %178 = vmatpush2.msra.mxu0 0.0
    %179 = vmatprep.subr.mxu0 0.0
    %180 = vmatpush2.msra.mxu0 0.0
    %181 = vmatprep.subr.mxu0 0.0
    %182 = vmatpush2.msra.mxu0 0.0
    %183 = vmatprep.mubr.f32.mxu0 0.0
    %184 = vmatmul.mubr.f32.gmra.mxu0 %v43
    %v185 = vpop.f32.mrf.mxu0
    %v186 = vadd.f32 %v116, %v185
    %v187 = vpop.f32.mrf.mxu0
    %188 = vdwg.mxu0
    %v189 = vlaneseq
    %v190 = vshrl.u32 %v189, 7
    %v191 = vsub.s32 0, %v190
    %v192 = vrot.slane %v41, %v191
    %v193 = vadd.f32 %v186, %v192
    %v194 = vmax.f32 %v193, 0.0
    %v195 = vlaneseq
    %v196 = vshrl.u32 %v195, 7
    %v197 = vsub.s32 0, %v196
    %v198 = vrot.slane %v42, %v197
    %vm199 = vcmask 261120
    %v201 = vsel %vm199, %v194, 0
    %203 = vmatprep.subr.mxu0 0.0
    %204 = vmatpush1.msra.mxu0 0.0
    %205 = vmatprep.subr.mxu0 0.0
    %206 = vmatpush1.msra.mxu0 0.0
    %207 = vmatprep.subr.mxu0 0.0
    %208 = vmatpush1.msra.mxu0 0.0
    %209 = vmatprep.subr.mxu0 0.0
    %210 = vmatpush1.msra.mxu0 0.0
    %211 = vmatprep.subr.mxu0 0.0
    %212 = vmatpush1.msra.mxu0 0.0
    %213 = vmatprep.subr.mxu0 0.0
    %214 = vmatpush1.msra.mxu0 0.0
    %215 = vmatprep.subr.mxu0 0.0
    %216 = vmatpush1.msra.mxu0 0.0
    %217 = vmatprep.subr.mxu0 0.0
    %218 = vmatpush1.msra.mxu0 0.0
    %219 = vmatprep.subr.mxu0 0.0
    %220 = vmatpush1.msra.mxu0 0.0
    %221 = vmatprep.subr.mxu0 0.0
    %222 = vmatpush1.msra.mxu0 0.0
    %223 = vmatprep.subr.mxu0 0.0
    %224 = vmatpush1.msra.mxu0 0.0
    %225 = vmatprep.subr.mxu0 0.0
    %226 = vmatpush1.msra.mxu0 0.0
    %227 = vmatprep.subr.mxu0 0.0
    %228 = vmatpush1.msra.mxu0 %v36
    %229 = vmatprep.subr.mxu0 0.0
    %230 = vmatpush1.msra.mxu0 %v35
    %231 = vmatprep.subr.mxu0 0.0
    %232 = vmatpush1.msra.mxu0 %v34
    %233 = vmatprep.subr.mxu0 0.0
    %234 = vmatpush1.msra.mxu0 %v33
    %235 = vmatprep.subr.mxu0 0.0
    %236 = vmatpush2.msra.mxu0 0.0
    %237 = vmatprep.subr.mxu0 0.0
    %238 = vmatpush2.msra.mxu0 0.0
    %239 = vmatprep.subr.mxu0 0.0
    %240 = vmatpush2.msra.mxu0 0.0
    %241 = vmatprep.subr.mxu0 0.0
    %242 = vmatpush2.msra.mxu0 0.0
    %243 = vmatprep.subr.mxu0 0.0
    %244 = vmatpush2.msra.mxu0 0.0
    %245 = vmatprep.subr.mxu0 0.0
    %246 = vmatpush2.msra.mxu0 0.0
    %247 = vmatprep.subr.mxu0 0.0
    %248 = vmatpush2.msra.mxu0 0.0
    %249 = vmatprep.subr.mxu0 0.0
    %250 = vmatpush2.msra.mxu0 0.0
    %251 = vmatprep.subr.mxu0 0.0
    %252 = vmatpush2.msra.mxu0 0.0
    %253 = vmatprep.subr.mxu0 0.0
    %254 = vmatpush2.msra.mxu0 0.0
    %255 = vmatprep.subr.mxu0 0.0
    %256 = vmatpush2.msra.mxu0 0.0
    %257 = vmatprep.subr.mxu0 0.0
    %258 = vmatpush2.msra.mxu0 0.0
    %259 = vmatprep.subr.mxu0 0.0
    %260 = vmatpush2.msra.mxu0 0.0
    %261 = vmatprep.subr.mxu0 0.0
    %262 = vmatpush2.msra.mxu0 0.0
    %263 = vmatprep.subr.mxu0 0.0
    %264 = vmatpush2.msra.mxu0 0.0
    %265 = vmatprep.subr.mxu0 0.0
    %266 = vmatpush2.msra.mxu0 0.0
    %267 = vmatprep.mubr.f32.mxu0 0.0
    %268 = vmatmul.mubr.f32.gmra.mxu0 %v201
    %v269 = vpop.f32.mrf.mxu0
    %v270 = vadd.f32 %v198, %v269
    %v271 = vpop.f32.mrf.mxu0
    %272 = vdwg.mxu0
    %v273 = vmax.f32 %v270, 0.0
    %v275 = vsel %vm199, %v273, 0
    %277 = vmatprep.subr.mxu0 0.0
    %278 = vmatpush1.msra.mxu0 0.0
    %279 = vmatprep.subr.mxu0 0.0
    %280 = vmatpush1.msra.mxu0 0.0
    %281 = vmatprep.subr.mxu0 0.0
    %282 = vmatpush1.msra.mxu0 0.0
    %283 = vmatprep.subr.mxu0 0.0
    %284 = vmatpush1.msra.mxu0 0.0
    %285 = vmatprep.subr.mxu0 0.0
    %286 = vmatpush1.msra.mxu0 0.0
    %287 = vmatprep.subr.mxu0 0.0
    %288 = vmatpush1.msra.mxu0 0.0
    %289 = vmatprep.subr.mxu0 0.0
    %290 = vmatpush1.msra.mxu0 0.0
    %291 = vmatprep.subr.mxu0 0.0
    %292 = vmatpush1.msra.mxu0 0.0
    %293 = vmatprep.subr.mxu0 0.0
    %294 = vmatpush1.msra.mxu0 0.0
    %295 = vmatprep.subr.mxu0 0.0
    %296 = vmatpush1.msra.mxu0 0.0
    %297 = vmatprep.subr.mxu0 0.0
    %298 = vmatpush1.msra.mxu0 0.0
    %299 = vmatprep.subr.mxu0 0.0
    %300 = vmatpush1.msra.mxu0 0.0
    %301 = vmatprep.subr.mxu0 0.0
    %302 = vmatpush1.msra.mxu0 %v40
    %303 = vmatprep.subr.mxu0 0.0
    %304 = vmatpush1.msra.mxu0 %v39
    %305 = vmatprep.subr.mxu0 0.0
    %306 = vmatpush1.msra.mxu0 %v38
    %307 = vmatprep.subr.mxu0 0.0
    %308 = vmatpush1.msra.mxu0 %v37
    %309 = vmatprep.subr.mxu0 0.0
    %310 = vmatpush2.msra.mxu0 0.0
    %311 = vmatprep.subr.mxu0 0.0
    %312 = vmatpush2.msra.mxu0 0.0
    %313 = vmatprep.subr.mxu0 0.0
    %314 = vmatpush2.msra.mxu0 0.0
    %315 = vmatprep.subr.mxu0 0.0
    %316 = vmatpush2.msra.mxu0 0.0
    %317 = vmatprep.subr.mxu0 0.0
    %318 = vmatpush2.msra.mxu0 0.0
    %319 = vmatprep.subr.mxu0 0.0
    %320 = vmatpush2.msra.mxu0 0.0
    %321 = vmatprep.subr.mxu0 0.0
    %322 = vmatpush2.msra.mxu0 0.0
    %323 = vmatprep.subr.mxu0 0.0
    %324 = vmatpush2.msra.mxu0 0.0
    %325 = vmatprep.subr.mxu0 0.0
    %326 = vmatpush2.msra.mxu0 0.0
    %327 = vmatprep.subr.mxu0 0.0
    %328 = vmatpush2.msra.mxu0 0.0
    %329 = vmatprep.subr.mxu0 0.0
    %330 = vmatpush2.msra.mxu0 0.0
    %331 = vmatprep.subr.mxu0 0.0
    %332 = vmatpush2.msra.mxu0 0.0
    %333 = vmatprep.subr.mxu0 0.0
    %334 = vmatpush2.msra.mxu0 0.0
    %335 = vmatprep.subr.mxu0 0.0
    %336 = vmatpush2.msra.mxu0 0.0
    %337 = vmatprep.subr.mxu0 0.0
    %338 = vmatpush2.msra.mxu0 0.0
    %339 = vmatprep.subr.mxu0 0.0
    %340 = vmatpush2.msra.mxu0 0.0
    %341 = vmatprep.mubr.f32.mxu0 0.0
    %342 = vmatmul.mubr.f32.gmra.mxu0 %v275
    %v343 = vpop.f32.mrf.mxu0
    %v344 = vadd.f32 0.0, %v343
    %v345 = vpop.f32.mrf.mxu0
    %346 = vdwg.mxu0
    %vm347 = vcmask 123904
    %348 = vst.msk [vmem:[#allocation2] sm:$0x3] %vm347, %v344
    // Predicated region
    $region14: #{_lambda_.1} parent=1 // pred_check
      _
    $region15: #{_lambda_.1} parent=1 // pred_check_branch
      %350 = sbr.rel (0) target = $region17
    $region16: #{_lambda_.1} parent=1 // pred_region
      %s352 = ssub.s32 32, 32
      %353 = vsyncadd [#allocation3], %s352
      %s355 = sshll.u32 [#allocation2], 4
      %s356 = int_to_ptr.vmem [resolvable:$true] %s355
      %358 = dma.vmem_to_hbm [thread:$0]  %s356, 32, %s3, [#allocation3]
    $region17: #{_lambda_.1} parent=1 // pred_fallthru
      _
    // Predicated region
    $region18: #{_lambda_.1} parent=1 // pred_check
      _
    $region19: #{_lambda_.1} parent=1 // pred_check_branch
      %360 = sbr.rel (0) target = $region21
    $region20: #{_lambda_.1} parent=1 // pred_region
      %361 = dma.done [#allocation3], 32
    $region21: #{_lambda_.1} parent=1 // pred_fallthru
      _
    %362 = vsyncpa [#allocation3], 1

</llo_original>
